<compile_context>
chip_gen: v5e
topology: v5e:2x2
jax: 0.10.0
libtpu: 0.0.40
codegen_flags: <defaults>
</compile_context>

<pallas_src>
import functools

import jax
import jax.numpy as jnp
from jax.experimental import pallas as pl
from jax.experimental.pallas import tpu as pltpu


def _wce_kernel(logits_ref, targets_ref, weights_ref, nll_ref):
    # [TN, C] block, upcast to f32 inside the kernel (input streamed in native dtype).
    x = logits_ref[...].astype(jnp.float32)

    # Numerically-stable log-sum-exp along the class (lane) axis.
    m = jnp.max(x, axis=-1, keepdims=True)                 # [TN, 1]
    shifted = x - m                                        # [TN, C]
    lse = jnp.log(jnp.sum(jnp.exp(shifted), axis=-1, keepdims=True))  # [TN, 1]

    # Gather shifted[i, targets[i]] via class-index mask (no dynamic gather on TPU),
    # without materializing the full log_probs array.
    cls_ids = jax.lax.broadcasted_iota(jnp.int32, shifted.shape, 1)   # [TN, C]
    tgt = targets_ref[...]                                 # [TN, 1] int32
    tgt_shifted = jnp.sum(jnp.where(cls_ids == tgt, shifted, 0.0),
                          axis=-1, keepdims=True)          # [TN, 1]
    target_lp = tgt_shifted - lse                          # [TN, 1]

    # Per-row weighted NLL; normalization over the true N happens in the wrapper.
    nll_ref[...] = -weights_ref[...] * target_lp           # [TN, 1]


def _round_up(x, m):
    return ((x + m - 1) // m) * m


def _choose_row_tile(n, c, itemsize):
    # Keep one logits buffer around ~4 MiB so 2x double-buffering (+ small side buffers)
    # stays well inside the scoped-VMEM budget on v5e/v6e/v7x.
    budget_bytes = 4 * 1024 * 1024
    tn = budget_bytes // max(1, c * itemsize)
    tn = max(8, min(1024, (tn // 8) * 8))
    tn = min(tn, _round_up(n, 8))
    return tn


def weighted_cross_entropy_loss(logits, targets, weights=None, *, row_tile=None):
    """JAX/Pallas equivalent of WeightedCrossEntropyLoss.forward."""
    n, c = logits.shape

    if targets.ndim == 2:
        targets = jnp.argmax(targets, axis=1)      # matches torch.argmax(targets, dim=1)
    targets = targets.astype(jnp.int32)

    if weights is None:
        weights = jnp.ones((n,), dtype=jnp.float32)
    weights = weights.astype(jnp.float32)

    itemsize = jnp.dtype(logits.dtype).itemsize
    tn = row_tile if row_tile is not None else _choose_row_tile(n, c, itemsize)
    n_pad = _round_up(n, tn)

    pad = n_pad - n
    if pad:
        logits = jnp.pad(logits, ((0, pad), (0, 0)))
        targets = jnp.pad(targets, (0, pad))
        weights = jnp.pad(weights, (0, pad))       # zero weights => padded rows contribute 0

    t2 = targets.reshape(n_pad, 1)
    w2 = weights.reshape(n_pad, 1)

    grid = (n_pad // tn,)
    nll = pl.pallas_call(
        _wce_kernel,
        out_shape=jax.ShapeDtypeStruct((n_pad, 1), jnp.float32),
        grid=grid,
        in_specs=[
            pl.BlockSpec((tn, c), lambda i: (i, 0)),   # logits  [TN, C] (native dtype)
            pl.BlockSpec((tn, 1), lambda i: (i, 0)),   # targets [TN, 1] int32
            pl.BlockSpec((tn, 1), lambda i: (i, 0)),   # weights [TN, 1] f32
        ],
        out_specs=pl.BlockSpec((tn, 1), lambda i: (i, 0)),
        compiler_params=pltpu.CompilerParams(
            dimension_semantics=("parallel",),
            vmem_limit_bytes=32 * 1024 * 1024,
        ),
    )(logits, t2, w2)

    # Mean over the true N (padded rows are sliced away).
    return jnp.sum(nll[:n, 0]) / jnp.float32(n)


if __name__ == "__main__":
    key = jax.random.PRNGKey(0)
    k_logits, k_targets, k_weights = jax.random.split(key, 3)

    N, C = 8, 32
    logits = jax.random.normal(k_logits, (N, C), dtype=jnp.float32)
    target_idx = jax.random.randint(k_targets, (N,), 0, C)
    targets_onehot = jax.nn.one_hot(target_idx, C, dtype=jnp.float32)
    weights = jax.random.uniform(k_weights, (N,), dtype=jnp.float32) + 0.5

    # 2-D (one-hot) targets + explicit weights
    loss = weighted_cross_entropy_loss(logits, targets_onehot, weights)
    jax.block_until_ready(loss)

    lp = jax.nn.log_softmax(logits, axis=-1)
    ref = jnp.mean(-weights * lp[jnp.arange(N), target_idx])
    assert jnp.allclose(loss, ref, atol=1e-5, rtol=1e-5), (loss, ref)

    # 1-D index targets + default weights (None -> ones)
    loss_nw = weighted_cross_entropy_loss(logits, target_idx, None)
    jax.block_until_ready(loss_nw)
    ref_nw = jnp.mean(-lp[jnp.arange(N), target_idx])
    assert jnp.allclose(loss_nw, ref_nw, atol=1e-5, rtol=1e-5), (loss_nw, ref_nw)

    # Exercise the multi-tile / ragged-N path (padding + grid > 1) with bf16 logits.
    N2, C2 = 70, 64
    k2a, k2b, k2c = jax.random.split(jax.random.PRNGKey(0), 3)
    logits2 = jax.random.normal(k2a, (N2, C2), dtype=jnp.float32)
    idx2 = jax.random.randint(k2b, (N2,), 0, C2)
    w2v = jax.random.uniform(k2c, (N2,), dtype=jnp.float32) + 0.5
    loss2 = weighted_cross_entropy_loss(logits2.astype(jnp.bfloat16), idx2, w2v, row_tile=16)
    jax.block_until_ready(loss2)
    lp2 = jax.nn.log_softmax(logits2.astype(jnp.bfloat16).astype(jnp.float32), axis=-1)
    ref2 = jnp.mean(-w2v * lp2[jnp.arange(N2), idx2])
    assert jnp.allclose(loss2, ref2, atol=1e-4, rtol=1e-4), (loss2, ref2)

    print("KERNEL_OK")
</pallas_src>

<mosaic_0001>
module attributes {stable_mosaic.version = 11 : i64} {
  func.func @_wce_kernel(%arg0: i32, %arg1: memref<8x32xf32, #tpu.memory_space<vmem>>, %arg2: memref<8x1xi32, #tpu.memory_space<vmem>>, %arg3: memref<8x1xf32, #tpu.memory_space<vmem>>, %arg4: memref<8x1xf32, #tpu.memory_space<vmem>>) attributes {dimension_semantics = [#tpu.dimension_semantics<parallel>], iteration_bounds = array<i64: 1>, scalar_prefetch = 0 : i64, scratch_operands = 0 : i64, tpu.core_type = #tpu.core_type<tc>, window_params = [{transform_indices = @transform_0, window_bounds = array<i64: 8, 32>}, {transform_indices = @transform_1, window_bounds = array<i64: 8, 1>}, {transform_indices = @transform_2, window_bounds = array<i64: 8, 1>}, {transform_indices = @transform_3, window_bounds = array<i64: 8, 1>}]} {
    %c0 = arith.constant 0 : index
    %c0_0 = arith.constant 0 : index
    %0 = vector.load %arg1[%c0, %c0_0] : memref<8x32xf32, #tpu.memory_space<vmem>>, vector<8x32xf32>
    %cst = arith.constant dense<0xFF800000> : vector<8xf32>
    %1 = vector.multi_reduction <maximumf>, %0, %cst [1] : vector<8x32xf32> to vector<8xf32>
    %2 = vector.shape_cast %1 : vector<8xf32> to vector<8x1xf32>
    %3 = vector.broadcast %2 : vector<8x1xf32> to vector<8x32xf32>
    %4 = arith.subf %0, %3 : vector<8x32xf32>
    %5 = math.exp %4 : vector<8x32xf32>
    %cst_1 = arith.constant dense<0.000000e+00> : vector<8xf32>
    %6 = vector.multi_reduction <add>, %5, %cst_1 [1] : vector<8x32xf32> to vector<8xf32>
    %7 = vector.shape_cast %6 : vector<8xf32> to vector<8x1xf32>
    %8 = math.log %7 : vector<8x1xf32>
    %9 = tpu.iota {dimensions = array<i32: 1>} : vector<8x32xi32>
    %c0_2 = arith.constant 0 : index
    %c0_3 = arith.constant 0 : index
    %10 = vector.load %arg2[%c0_2, %c0_3] : memref<8x1xi32, #tpu.memory_space<vmem>>, vector<8x1xi32>
    %11 = vector.broadcast %10 : vector<8x1xi32> to vector<8x32xi32>
    %12 = arith.cmpi eq, %9, %11 : vector<8x32xi32>
    %cst_4 = arith.constant 0.000000e+00 : f32
    %13 = vector.broadcast %cst_4 : f32 to vector<8x32xf32>
    %14 = arith.select %12, %4, %13 : vector<8x32xi1>, vector<8x32xf32>
    %cst_5 = arith.constant dense<0.000000e+00> : vector<8xf32>
    %15 = vector.multi_reduction <add>, %14, %cst_5 [1] : vector<8x32xf32> to vector<8xf32>
    %16 = vector.shape_cast %15 : vector<8xf32> to vector<8x1xf32>
    %17 = arith.subf %16, %8 : vector<8x1xf32>
    %c0_6 = arith.constant 0 : index
    %c0_7 = arith.constant 0 : index
    %18 = vector.load %arg3[%c0_6, %c0_7] : memref<8x1xf32, #tpu.memory_space<vmem>>, vector<8x1xf32>
    %cst_8 = arith.constant 0.000000e+00 : f32
    %19 = vector.broadcast %cst_8 : f32 to vector<8x1xf32>
    %20 = arith.subf %19, %18 : vector<8x1xf32>
    %21 = arith.mulf %20, %17 : vector<8x1xf32>
    %c0_9 = arith.constant 0 : index
    %c0_10 = arith.constant 0 : index
    %22 = vector.load %arg4[%c0_9, %c0_10] : memref<8x1xf32, #tpu.memory_space<vmem>>, vector<8x1xf32>
    tpu.vector_store %arg4[%c0_9, %c0_10], %21 {strides = array<i32>} : memref<8x1xf32, #tpu.memory_space<vmem>>, vector<8x1xf32>,
    return
  }
  func.func @transform_0(%arg0: i32) -> (i32, i32) {
    %c0_i32 = arith.constant 0 : i32
    %c0_i32_0 = arith.constant 0 : i32
    return %arg0, %c0_i32 : i32, i32
  }
  func.func @transform_1(%arg0: i32) -> (i32, i32) {
    %c0_i32 = arith.constant 0 : i32
    %c0_i32_0 = arith.constant 0 : i32
    return %arg0, %c0_i32 : i32, i32
  }
  func.func @transform_2(%arg0: i32) -> (i32, i32) {
    %c0_i32 = arith.constant 0 : i32
    %c0_i32_0 = arith.constant 0 : i32
    return %arg0, %c0_i32 : i32, i32
  }
  func.func @transform_3(%arg0: i32) -> (i32, i32) {
    %c0_i32 = arith.constant 0 : i32
    %c0_i32_0 = arith.constant 0 : i32
    return %arg0, %c0_i32 : i32, i32
  }
}

</mosaic_0001>

<llo_original>
// kernel: tpu_custom_call.1
$region0: #{tpu_custom_call.1}
  #allocation0 [shape = 'u32[]', space=smem, size = 0x4, offset = 0x4, fixed_abs, tag = 'smem constant byte address 0x4 - core index']
  #allocation1 [shape = 'u32[72,128]{1,0:T(1,128)}', space=vmem, size = 0x9000, scoped, tag = 'internal scratch']
  %s0 = inlined_call_operand.vmem [shape: f32[8,32], index: 0, kind: input, shape index: {}]
  %s1 = inlined_call_operand.vmem [shape: s32[8,1], index: 1, kind: input, shape index: {}]
  %s2 = inlined_call_operand.vmem [shape: f32[8,1], index: 2, kind: input, shape index: {}]
  %s3 = inlined_call_operand.vmem [shape: f32[8,1], index: 3, kind: output, shape index: {}]
  %s4 = sld [smem:[#allocation0]]
  $region22: #{tpu_custom_call.1} parent=0
    _
  %s6 = ssub.s32 1, %s4
  %s7 = scalar_select 0, %s6, %s4
  // Predicated region
  $region2: #{tpu_custom_call.1} parent=0 // pred_check
    _
  $region3: #{tpu_custom_call.1} parent=0 // pred_check_branch
    %9 = sbr.rel (0) target = $region5
  $region4: #{tpu_custom_call.1} parent=0 // pred_region
    _
  $region5: #{tpu_custom_call.1} parent=0 // pred_fallthru
    _
  // Predicated region
  $region6: #{tpu_custom_call.1} parent=0 // pred_check
    _
  $region7: #{tpu_custom_call.1} parent=0 // pred_check_branch
    %11 = sbr.rel (0) target = $region9
  $region8: #{tpu_custom_call.1} parent=0 // pred_region
    _
  $region9: #{tpu_custom_call.1} parent=0 // pred_fallthru
    _
  // Predicated region
  $region10: #{tpu_custom_call.1} parent=0 // pred_check
    _
  $region11: #{tpu_custom_call.1} parent=0 // pred_check_branch
    %13 = sbr.rel (0) target = $region13
  $region12: #{tpu_custom_call.1} parent=0 // pred_region
    _
  $region13: #{tpu_custom_call.1} parent=0 // pred_fallthru
    _
  %v14 = vld [vmem:[%s0] sm:$0xff]
  %vm15 = vcmask 261120
  %v16 = vsel %vm15, %v14, -inf
  %17 = vmax.xlane.f32.xlu0 %v16
  %v18 = vpop.xlane.xlu0 %17
  %v19 = vsub.f32 %v14, %v18
  %v20 = vmul.f32 %v19, 1.442695
  %v21 = vpow.pop %v20
  %v22 = vsel %vm15, %v21, 0.0
  %23 = vadd.xlane.f32.xlu0 %v22
  %v24 = vpop.xlane.xlu0 %23
  %v25 = vlog2.pop %v24
  %v26 = vmul.f32 %v25, 0.6931472
  %v27 = vlaneseq
  %v28 = vand.u32 %v27, 127
  %v29 = vld [vmem:[%s1] sm:$0xff]
  %30 = vset.pattern.permute.xlu0 0
  %31 = vperm.xlu0 %30, %v29
  %v32 = vpop.permute.xlu0 %31
  %vm33 = vcmp.eq.s32.totalorder %v28, %v32
  %v34 = vsel %vm33, %v19, 0.0
  %v35 = vsel %vm15, %v34, 0.0
  %36 = vadd.xlane.f32.xlu0 %v35
  %v37 = vpop.xlane.xlu0 %36
  %v38 = vsub.f32 %v37, %v26
  %v39 = vld [vmem:[%s2] sm:$0xff]
  %v40 = vsub.f32 0.0, %v39
  %v41 = vmul.f32 %v40, %v38
  %vm42 = vcmask 7168
  %43 = vst.msk [vmem:[%s3] sm:$0xff] %vm42, %v41
  // Predicated region
  $region14: #{tpu_custom_call.1} parent=0 // pred_check
    _
  $region15: #{tpu_custom_call.1} parent=0 // pred_check_branch
    %45 = sbr.rel (0) target = $region17
  $region16: #{tpu_custom_call.1} parent=0 // pred_region
    _
  $region17: #{tpu_custom_call.1} parent=0 // pred_fallthru
    _
  // Predicated region
  $region18: #{tpu_custom_call.1} parent=0 // pred_check
    _
  $region19: #{tpu_custom_call.1} parent=0 // pred_check_branch
    %47 = sbr.rel (0) target = $region21
  $region20: #{tpu_custom_call.1} parent=0 // pred_region
    _
  $region21: #{tpu_custom_call.1} parent=0 // pred_fallthru
    _

</llo_original>
